<compile_context>
chip_gen: v5e
topology: v5e:2x2
jax: 0.10.0
libtpu: 0.0.40
codegen_flags: <defaults>
</compile_context>

<pallas_src>
import functools

import jax
import jax.numpy as jnp
from jax import lax
from jax.experimental import pallas as pl
from jax.experimental.pallas import tpu as pltpu

NEG_INF = -1000000000.0  # matches masked_fill_(-1e9)


def _leaky_relu(x, slope=0.1):
    return jnp.where(x > 0, x, slope * x)


def const_scorer_kernel(enc_ref, wf_ref, wb_ref, b_ref, uy_ref, null_ref, out_ref,
                        *, n, hdim, mx_p, n_labels, null_idx):
    """One batch element: scores for every (start, end, label) triple.

    enc_ref : (1, S, 2H) f32    encoder states (S = n + 1)
    wf_ref  : (H, mx_p+My) bf16 MLP weights hit by the forward half
    wb_ref  : (H, mx_p+My) bf16 MLP weights hit by the backward half
    b_ref   : (1, mx_p+My) f32  MLP biases (biaffine ones-columns folded in)
    uy_ref  : (My, L*mx_p) bf16 block-diagonal bilinear tensor, flattened
    null_ref: (1, n*L) i32      1 on lanes whose label == null_idx
    out_ref : (1, n, n*L) f32   flat scores, lane index = end*L + label
    """
    e = enc_ref[0]                                      # (S, 2H) f32
    xf = e[:-1, :hdim].astype(jnp.bfloat16)             # fwd states, tokens 0..n-1
    xb = e[1:, hdim:].astype(jnp.bfloat16)              # bwd states, tokens 1..n

    # All four MLPs (label-x | span-x | label-y | span-y) in two matmuls.
    h = (jnp.dot(xf, wf_ref[...], preferred_element_type=jnp.float32)
         + jnp.dot(xb, wb_ref[...], preferred_element_type=jnp.float32)
         + b_ref[...])
    h = _leaky_relu(h)                                   # eval-mode dropout = identity
    hx = h[:, :mx_p].astype(jnp.bfloat16)                # (n, mx_p)  [label-x|span-x|0pad]
    hy = h[:, mx_p:].astype(jnp.bfloat16)                # (n, My)    [label-y|span-y]

    # Biaffine stage 1, all labels at once (span block folded in):
    #   ty[y, o*mx_p + i] = sum_j U[o, i, j] * hy[y, j]
    ty = jnp.dot(hy, uy_ref[...], preferred_element_type=jnp.float32)  # (n, L*mx_p)
    # lane -> sublane retile (mx_p is a multiple of 128): row = y*L + o, col = i
    ty_r = ty.reshape(n * n_labels, mx_p).astype(jnp.bfloat16)

    # Stage 2: s[x, y*L + o] = sum_i hx[x, i] * ty_r[y*L + o, i]
    s = lax.dot_general(hx, ty_r, (((1,), (1,)), ((), ())),
                        preferred_element_type=jnp.float32)            # (n, n*L)

    # NULL label is only kept on the super-diagonal (end == start + 1).
    row = lax.broadcasted_iota(jnp.int32, s.shape, 0)
    col = lax.broadcasted_iota(jnp.int32, s.shape, 1)
    allowed = col == (row + 1) * n_labels + null_idx
    is_null = jnp.broadcast_to(null_ref[...], s.shape) != 0
    kill = jnp.logical_and(is_null, jnp.logical_not(allowed))
    out_ref[0] = jnp.where(kill, NEG_INF, s).astype(out_ref.dtype)


def _pack_params(params):
    """Fold label + span scorers into one padded, mostly-bf16 parameter set."""
    w_lx, b_lx = params["w_lx"], params["b_lx"]
    w_ly, b_ly = params["w_ly"], params["b_ly"]
    w_sx, b_sx = params["w_sx"], params["b_sx"]
    w_sy, b_sy = params["w_sy"], params["b_sy"]
    u_label, u_span = params["u_label"], params["u_span"]

    L, mlx, mly = u_label.shape
    msx, msy = u_span.shape[1], u_span.shape[2]
    mx = mlx + msx                     # combined x-side feature width
    my = mly + msy                     # combined y-side feature width
    mx_p = ((mx + 127) // 128) * 128   # pad so the in-kernel retile is 128-aligned

    wx = jnp.pad(jnp.concatenate([w_lx, w_sx], axis=1), ((0, 0), (0, mx_p - mx)))
    bx = jnp.pad(jnp.concatenate([b_lx, b_sx], axis=1), ((0, 0), (0, mx_p - mx)))
    wy = jnp.concatenate([w_ly, w_sy], axis=1)
    by = jnp.concatenate([b_ly, b_sy], axis=1)
    w_all = jnp.concatenate([wx, wy], axis=1)              # (2H, mx_p + my)
    b_all = jnp.concatenate([bx, by], axis=1)              # (1,  mx_p + my)

    # Block-diagonal bilinear tensor: label block + span block (same span score
    # added to every label, i.e. s_label + s_span[..., None]).
    u_comb = jnp.zeros((L, mx_p, my), jnp.float32)
    u_comb = u_comb.at[:, :mlx, :mly].set(u_label)
    u_comb = u_comb.at[:, mlx:mlx + msx, mly:].set(
        jnp.broadcast_to(u_span, (L, msx, msy)))
    # u_flat_y[j, o*mx_p + i] = u_comb[o, i, j]
    u_flat_y = jnp.transpose(u_comb, (2, 0, 1)).reshape(my, L * mx_p)

    H = w_all.shape[0] // 2
    return dict(
        wf=w_all[:H].astype(jnp.bfloat16),
        wb=w_all[H:].astype(jnp.bfloat16),
        b_all=b_all.astype(jnp.float32),
        u_flat_y=u_flat_y.astype(jnp.bfloat16),
        mx_p=mx_p,
        n_labels=L,
    )


@functools.partial(jax.jit, static_argnames=("null_idx",))
def const_scorer_forward(encoded_emb, params, null_idx):
    """encoded_emb: (B, S, 2H) float32. Returns s_span: (B, S-1, S-1, L) float32."""
    B, S, D2 = encoded_emb.shape
    H = D2 // 2
    n = S - 1

    packed = _pack_params(params)
    L = packed["n_labels"]
    mx_p = packed["mx_p"]
    mt = packed["wf"].shape[1]          # mx_p + my
    my = mt - mx_p
    n_l = n * L

    # lanes whose label slot equals NULL (constant-folded by XLA under jit;
    # avoids an integer mod inside the kernel)
    null_lane = (jnp.arange(n_l, dtype=jnp.int32) % L == null_idx
                 ).astype(jnp.int32)[None, :]

    kernel = functools.partial(
        const_scorer_kernel,
        n=n, hdim=H, mx_p=mx_p, n_labels=L, null_idx=null_idx)

    # Advisory cost hint for XLA's scheduler around the custom call.
    flops_per_b = (2 * n * H * mt * 2          # two MLP matmuls
                   + 2 * n * my * (L * mx_p)   # biaffine stage 1
                   + 2 * n * n_l * mx_p)       # biaffine stage 2
    bytes_accessed = int(
        encoded_emb.size * 4
        + (packed["wf"].size + packed["wb"].size + packed["u_flat_y"].size) * 2
        + packed["b_all"].size * 4 + null_lane.size * 4
        + B * n * n_l * 4)
    cost = pl.CostEstimate(flops=B * flops_per_b, transcendentals=0,
                           bytes_accessed=bytes_accessed)

    out_flat = pl.pallas_call(
        kernel,
        out_shape=jax.ShapeDtypeStruct((B, n, n_l), jnp.float32),
        grid=(B,),
        in_specs=[
            pl.BlockSpec((1, S, D2), lambda b: (b, 0, 0)),     # encoder states
            pl.BlockSpec((H, mt), lambda b: (0, 0)),           # wf (bf16, constant)
            pl.BlockSpec((H, mt), lambda b: (0, 0)),           # wb (bf16, constant)
            pl.BlockSpec((1, mt), lambda b: (0, 0)),           # biases (f32)
            pl.BlockSpec((my, L * mx_p), lambda b: (0, 0)),    # bilinear tensor (bf16)
            pl.BlockSpec((1, n_l), lambda b: (0, 0)),          # null-label lane mask
        ],
        out_specs=pl.BlockSpec((1, n, n_l), lambda b: (b, 0, 0)),
        compiler_params=pltpu.CompilerParams(
            dimension_semantics=("parallel",),
            vmem_limit_bytes=64 * 1024 * 1024,
        ),
        cost_estimate=cost,
    )(encoded_emb, packed["wf"], packed["wb"], packed["b_all"],
      packed["u_flat_y"], null_lane)

    # flat lane index is end*L + label -> (B, n, n, L) is a metadata-only reshape
    # (matches the PyTorch s_span layout; no transpose pass over HBM).
    return out_flat.reshape(B, n, n, L)


def make_params(key, input_dim, n_mlp_label, n_mlp_span, n_labels):
    """Deterministic synthetic parameters; biaffine ones-columns folded into the MLPs."""
    ks = jax.random.split(key, 9)
    scale = 0.1

    def ext_x(w, b):  # append zero weight column + bias 1.0 -> ones column after MLP
        w_ext = jnp.concatenate([w, jnp.zeros((w.shape[0], 1), w.dtype)], axis=1)
        b_ext = jnp.concatenate([b, jnp.ones((1, 1), b.dtype)], axis=1)
        return w_ext, b_ext

    # label scorer (bias_x=True, bias_y=True)
    w_lx = scale * jax.random.normal(ks[0], (input_dim, n_mlp_label), jnp.float32)
    b_lx = scale * jax.random.normal(ks[1], (1, n_mlp_label), jnp.float32)
    w_ly = scale * jax.random.normal(ks[2], (input_dim, n_mlp_label), jnp.float32)
    b_ly = scale * jax.random.normal(ks[3], (1, n_mlp_label), jnp.float32)
    w_lx, b_lx = ext_x(w_lx, b_lx)
    w_ly, b_ly = ext_x(w_ly, b_ly)
    u_label = scale * jax.random.normal(
        ks[4], (n_labels, n_mlp_label + 1, n_mlp_label + 1), jnp.float32)

    # span scorer (bias_x=True, bias_y=False, n_out_label=1)
    w_sx = scale * jax.random.normal(ks[5], (input_dim, n_mlp_span), jnp.float32)
    b_sx = scale * jax.random.normal(ks[6], (1, n_mlp_span), jnp.float32)
    w_sy = scale * jax.random.normal(ks[7], (input_dim, n_mlp_span), jnp.float32)
    b_sy = scale * jax.random.normal(ks[8], (1, n_mlp_span), jnp.float32)
    w_sx, b_sx = ext_x(w_sx, b_sx)
    u_span = scale * jax.random.normal(
        jax.random.fold_in(key, 99), (1, n_mlp_span + 1, n_mlp_span), jnp.float32)

    return dict(w_lx=w_lx, b_lx=b_lx, w_ly=w_ly, b_ly=b_ly, u_label=u_label,
                w_sx=w_sx, b_sx=b_sx, w_sy=w_sy, b_sy=b_sy, u_span=u_span)


def reference_forward(encoded_emb, params, null_idx):
    """Pure-JAX f32 reference mirroring the PyTorch module exactly."""
    B, S, D2 = encoded_emb.shape
    H = D2 // 2
    x = jnp.concatenate(
        [encoded_emb[:, :-1, :H], encoded_emb[:, 1:, H:]], axis=-1)  # (B, n, D2)
    n = S - 1

    hx = _leaky_relu(x @ params["w_lx"] + params["b_lx"])
    hy = _leaky_relu(x @ params["w_ly"] + params["b_ly"])
    s_lab = jnp.einsum("bxi,oij,byj->bxyo", hx, params["u_label"], hy)

    gx = _leaky_relu(x @ params["w_sx"] + params["b_sx"])
    gy = _leaky_relu(x @ params["w_sy"] + params["b_sy"])
    s_sp = jnp.einsum("bxi,oij,byj->bxyo", gx, params["u_span"], gy)[..., 0]

    s = s_lab + s_sp[..., None]
    row = jnp.arange(n)[:, None]
    col = jnp.arange(n)[None, :]
    allowed = col == row + 1
    s_null = jnp.where(allowed[None], s[..., null_idx], NEG_INF)
    return s.at[..., null_idx].set(s_null)


def _emulated_reference(encoded_emb, params, null_idx):
    """Pure-JAX replica of the kernel's exact (bf16-operand) arithmetic."""
    packed = _pack_params(params)
    B, S, D2 = encoded_emb.shape
    H = D2 // 2
    n = S - 1
    L = packed["n_labels"]
    mx_p = packed["mx_p"]

    xf = encoded_emb[:, :-1, :H].astype(jnp.bfloat16)
    xb = encoded_emb[:, 1:, H:].astype(jnp.bfloat16)
    h = (jnp.einsum("bnh,hm->bnm", xf, packed["wf"],
                    preferred_element_type=jnp.float32)
         + jnp.einsum("bnh,hm->bnm", xb, packed["wb"],
                      preferred_element_type=jnp.float32)
         + packed["b_all"])
    h = _leaky_relu(h)
    hx = h[..., :mx_p].astype(jnp.bfloat16)
    hy = h[..., mx_p:].astype(jnp.bfloat16)
    ty = jnp.einsum("bnm,mc->bnc", hy, packed["u_flat_y"],
                    preferred_element_type=jnp.float32)
    ty = ty.reshape(B, n * L, mx_p).astype(jnp.bfloat16)
    s = jnp.einsum("bxi,bci->bxc", hx, ty, preferred_element_type=jnp.float32)
    row = jnp.arange(n)[:, None]
    col = jnp.arange(n * L)[None, :]
    kill = (col % L == null_idx) & (col != (row + 1) * L + null_idx)
    s = jnp.where(kill[None], NEG_INF, s)
    return s.reshape(B, n, n, L)


if __name__ == "__main__":
    # Small deterministic config: B=2, S=8 (-> n=7 spans), encoded dim 32,
    # n_mlp_label = n_mlp_span = 32, chart vocab L=8, null_idx=0, use_span=True.
    B, S, H = 2, 8, 16
    input_dim = 2 * H
    n_mlp_label = n_mlp_span = 32
    n_labels = 8
    null_idx = 0

    key = jax.random.PRNGKey(0)
    k_x, k_p = jax.random.split(key)
    encoded_emb = jax.random.normal(k_x, (B, S, input_dim), jnp.float32)
    params = make_params(k_p, input_dim, n_mlp_label, n_mlp_span, n_labels)

    s_span = const_scorer_forward(encoded_emb, params, null_idx=null_idx)
    s_span = jax.block_until_ready(s_span)
    assert s_span.shape == (B, S - 1, S - 1, n_labels), s_span.shape

    # (1) Tight check vs. a pure-JAX replica of the kernel's bf16 arithmetic.
    emu = _emulated_reference(encoded_emb, params, null_idx)
    err_emu = float(jnp.max(jnp.abs(s_span - emu)))
    assert jnp.allclose(s_span, emu, atol=2e-3, rtol=2e-3), err_emu

    # (2) Semantic check vs. the f32 module reference (tolerance covers the
    #     bf16 rounding of the MXU operands; accumulation stays f32).
    ref = reference_forward(encoded_emb, params, null_idx)
    err_ref = float(jnp.max(jnp.abs(s_span - ref)))
    assert jnp.allclose(s_span, ref, atol=1e-1, rtol=5e-2), err_ref

    # TODO(synk): dropout inside BiaffineScorer's MLPs is eval-mode identity here.
    print("KERNEL_OK")
</pallas_src>

<mosaic_0001>
module attributes {stable_mosaic.version = 11 : i64} {
  func.func @const_scorer_kernel(%arg0: i32, %arg1: memref<1x8x32xf32, #tpu.memory_space<vmem>>, %arg2: memref<16x193xbf16, #tpu.memory_space<vmem>>, %arg3: memref<16x193xbf16, #tpu.memory_space<vmem>>, %arg4: memref<1x193xf32, #tpu.memory_space<vmem>>, %arg5: memref<65x1024xbf16, #tpu.memory_space<vmem>>, %arg6: memref<1x56xi32, #tpu.memory_space<vmem>>, %arg7: memref<1x7x56xf32, #tpu.memory_space<vmem>>) attributes {dimension_semantics = [#tpu.dimension_semantics<parallel>], iteration_bounds = array<i64: 2>, scalar_prefetch = 0 : i64, scratch_operands = 0 : i64, tpu.core_type = #tpu.core_type<tc>, window_params = [{transform_indices = @transform_0, window_bounds = array<i64: 1, 8, 32>}, {pipeline_mode = #tpu.pipeline_mode<synchronous>, transform_indices = @transform_1, window_bounds = array<i64: 16, 193>}, {pipeline_mode = #tpu.pipeline_mode<synchronous>, transform_indices = @transform_2, window_bounds = array<i64: 16, 193>}, {pipeline_mode = #tpu.pipeline_mode<synchronous>, transform_indices = @transform_3, window_bounds = array<i64: 1, 193>}, {pipeline_mode = #tpu.pipeline_mode<synchronous>, transform_indices = @transform_4, window_bounds = array<i64: 65, 1024>}, {pipeline_mode = #tpu.pipeline_mode<synchronous>, transform_indices = @transform_5, window_bounds = array<i64: 1, 56>}, {transform_indices = @transform_6, window_bounds = array<i64: 1, 7, 56>}]} {
    %c0 = arith.constant 0 : index
    %c0_0 = arith.constant 0 : index
    %c0_1 = arith.constant 0 : index
    %0 = vector.load %arg1[%c0, %c0_0, %c0_1] : memref<1x8x32xf32, #tpu.memory_space<vmem>>, vector<1x8x32xf32>
    %1 = vector.shape_cast %0 : vector<1x8x32xf32> to vector<8x32xf32>
    %2 = vector.extract_strided_slice %1 {offsets = [0, 0], sizes = [7, 16], strides = [1, 1]} : vector<8x32xf32> to vector<7x16xf32>
    %3 = arith.truncf %2 : vector<7x16xf32> to vector<7x16xbf16>
    %4 = vector.extract_strided_slice %1 {offsets = [1, 16], sizes = [7, 16], strides = [1, 1]} : vector<8x32xf32> to vector<7x16xf32>
    %5 = arith.truncf %4 : vector<7x16xf32> to vector<7x16xbf16>
    %c0_2 = arith.constant 0 : index
    %c0_3 = arith.constant 0 : index
    %6 = vector.load %arg2[%c0_2, %c0_3] : memref<16x193xbf16, #tpu.memory_space<vmem>>, vector<16x193xbf16>
    %cst = arith.constant dense<0.000000e+00> : vector<7x193xf32>
    %7 = tpu.matmul %3, %6, %cst {dimension_numbers = #tpu.dot_dimension_numbers<[1], [0], [0], [1], [0, 0, 1, 1], [], []>} : vector<7x16xbf16>, vector<16x193xbf16>, vector<7x193xf32> -> vector<7x193xf32>
    %c0_4 = arith.constant 0 : index
    %c0_5 = arith.constant 0 : index
    %8 = vector.load %arg3[%c0_4, %c0_5] : memref<16x193xbf16, #tpu.memory_space<vmem>>, vector<16x193xbf16>
    %cst_6 = arith.constant dense<0.000000e+00> : vector<7x193xf32>
    %9 = tpu.matmul %5, %8, %cst_6 {dimension_numbers = #tpu.dot_dimension_numbers<[1], [0], [0], [1], [0, 0, 1, 1], [], []>} : vector<7x16xbf16>, vector<16x193xbf16>, vector<7x193xf32> -> vector<7x193xf32>
    %10 = arith.addf %7, %9 : vector<7x193xf32>
    %c0_7 = arith.constant 0 : index
    %c0_8 = arith.constant 0 : index
    %11 = vector.load %arg4[%c0_7, %c0_8] : memref<1x193xf32, #tpu.memory_space<vmem>>, vector<1x193xf32>
    %12 = vector.broadcast %11 : vector<1x193xf32> to vector<7x193xf32>
    %13 = arith.addf %10, %12 : vector<7x193xf32>
    %cst_9 = arith.constant 0.000000e+00 : f32
    %14 = vector.broadcast %cst_9 : f32 to vector<7x193xf32>
    %15 = arith.cmpf ogt, %13, %14 : vector<7x193xf32>
    %cst_10 = arith.constant 1.000000e-01 : f32
    %16 = vector.broadcast %cst_10 : f32 to vector<7x193xf32>
    %17 = arith.mulf %16, %13 : vector<7x193xf32>
    %18 = arith.select %15, %13, %17 : vector<7x193xi1>, vector<7x193xf32>
    %19 = vector.extract_strided_slice %18 {offsets = [0, 0], sizes = [7, 128], strides = [1, 1]} : vector<7x193xf32> to vector<7x128xf32>
    %20 = arith.truncf %19 : vector<7x128xf32> to vector<7x128xbf16>
    %21 = vector.extract_strided_slice %18 {offsets = [0, 128], sizes = [7, 65], strides = [1, 1]} : vector<7x193xf32> to vector<7x65xf32>
    %22 = arith.truncf %21 : vector<7x65xf32> to vector<7x65xbf16>
    %c0_11 = arith.constant 0 : index
    %c0_12 = arith.constant 0 : index
    %23 = vector.load %arg5[%c0_11, %c0_12] : memref<65x1024xbf16, #tpu.memory_space<vmem>>, vector<65x1024xbf16>
    %cst_13 = arith.constant dense<0.000000e+00> : vector<7x1024xf32>
    %24 = tpu.matmul %22, %23, %cst_13 {dimension_numbers = #tpu.dot_dimension_numbers<[1], [0], [0], [1], [0, 0, 1, 1], [], []>} : vector<7x65xbf16>, vector<65x1024xbf16>, vector<7x1024xf32> -> vector<7x1024xf32>
    %25 = vector.shape_cast %24 : vector<7x1024xf32> to vector<56x128xf32>
    %26 = arith.truncf %25 : vector<56x128xf32> to vector<56x128xbf16>
    %cst_14 = arith.constant dense<0.000000e+00> : vector<7x56xf32>
    %27 = tpu.matmul %20, %26, %cst_14 {dimension_numbers = #tpu.dot_dimension_numbers<[1], [1], [0], [0], [0, 0, 1, 0], [], []>} : vector<7x128xbf16>, vector<56x128xbf16>, vector<7x56xf32> -> vector<7x56xf32>
    %28 = tpu.iota {dimensions = array<i32: 0>} : vector<7x56xi32>
    %29 = tpu.iota {dimensions = array<i32: 1>} : vector<7x56xi32>
    %c1_i32 = arith.constant 1 : i32
    %30 = vector.broadcast %c1_i32 : i32 to vector<7x56xi32>
    %31 = arith.addi %28, %30 : vector<7x56xi32>
    %c8_i32 = arith.constant 8 : i32
    %32 = vector.broadcast %c8_i32 : i32 to vector<7x56xi32>
    %33 = arith.muli %31, %32 : vector<7x56xi32>
    %c0_i32 = arith.constant 0 : i32
    %34 = vector.broadcast %c0_i32 : i32 to vector<7x56xi32>
    %35 = arith.addi %33, %34 : vector<7x56xi32>
    %36 = arith.cmpi eq, %29, %35 : vector<7x56xi32>
    %c0_15 = arith.constant 0 : index
    %c0_16 = arith.constant 0 : index
    %37 = vector.load %arg6[%c0_15, %c0_16] : memref<1x56xi32, #tpu.memory_space<vmem>>, vector<1x56xi32>
    %38 = vector.shape_cast %37 : vector<1x56xi32> to vector<1x56xi32>
    %39 = vector.broadcast %38 : vector<1x56xi32> to vector<7x56xi32>
    %c0_i32_17 = arith.constant 0 : i32
    %40 = vector.broadcast %c0_i32_17 : i32 to vector<7x56xi32>
    %41 = arith.cmpi ne, %39, %40 : vector<7x56xi32>
    %cst_18 = arith.constant dense<true> : vector<7x56xi1>
    %42 = arith.xori %36, %cst_18 : vector<7x56xi1>
    %43 = arith.andi %41, %42 : vector<7x56xi1>
    %cst_19 = arith.constant -1.000000e+09 : f32
    %44 = vector.broadcast %cst_19 : f32 to vector<7x56xf32>
    %45 = arith.select %43, %44, %27 : vector<7x56xi1>, vector<7x56xf32>
    %c0_20 = arith.constant 0 : index
    %c0_21 = arith.constant 0 : index
    %c0_22 = arith.constant 0 : index
    %46 = vector.load %arg7[%c0_20, %c0_21, %c0_22] : memref<1x7x56xf32, #tpu.memory_space<vmem>>, vector<1x7x56xf32>
    %47 = vector.shape_cast %46 : vector<1x7x56xf32> to vector<7x56xf32>
    %48 = vector.shape_cast %45 : vector<7x56xf32> to vector<1x7x56xf32>
    tpu.vector_store %arg7[%c0_20, %c0_21, %c0_22], %48 {strides = array<i32>} : memref<1x7x56xf32, #tpu.memory_space<vmem>>, vector<1x7x56xf32>,
    return
  }
  func.func @transform_0(%arg0: i32) -> (i32, i32, i32) {
    %c0_i32 = arith.constant 0 : i32
    %c0_i32_0 = arith.constant 0 : i32
    %c0_i32_1 = arith.constant 0 : i32
    return %arg0, %c0_i32, %c0_i32_0 : i32, i32, i32
  }
  func.func @transform_1(%arg0: i32) -> (i32, i32) {
    %c0_i32 = arith.constant 0 : i32
    %c0_i32_0 = arith.constant 0 : i32
    %c0_i32_1 = arith.constant 0 : i32
    return %c0_i32, %c0_i32_0 : i32, i32
  }
  func.func @transform_2(%arg0: i32) -> (i32, i32) {
    %c0_i32 = arith.constant 0 : i32
    %c0_i32_0 = arith.constant 0 : i32
    %c0_i32_1 = arith.constant 0 : i32
    return %c0_i32, %c0_i32_0 : i32, i32
  }
  func.func @transform_3(%arg0: i32) -> (i32, i32) {
    %c0_i32 = arith.constant 0 : i32
    %c0_i32_0 = arith.constant 0 : i32
    %c0_i32_1 = arith.constant 0 : i32
    return %c0_i32, %c0_i32_0 : i32, i32
  }
  func.func @transform_4(%arg0: i32) -> (i32, i32) {
    %c0_i32 = arith.constant 0 : i32
    %c0_i32_0 = arith.constant 0 : i32
    %c0_i32_1 = arith.constant 0 : i32
    return %c0_i32, %c0_i32_0 : i32, i32
  }
  func.func @transform_5(%arg0: i32) -> (i32, i32) {
    %c0_i32 = arith.constant 0 : i32
    %c0_i32_0 = arith.constant 0 : i32
    %c0_i32_1 = arith.constant 0 : i32
    return %c0_i32, %c0_i32_0 : i32, i32
  }
  func.func @transform_6(%arg0: i32) -> (i32, i32, i32) {
    %c0_i32 = arith.constant 0 : i32
    %c0_i32_0 = arith.constant 0 : i32
    %c0_i32_1 = arith.constant 0 : i32
    return %arg0, %c0_i32, %c0_i32_0 : i32, i32, i32
  }
}

</mosaic_0001>

<llo_original>
// kernel: const_scorer_forward.1
$region0: #{const_scorer_forward.1}
  #allocation0 [shape = 'u32[]', space=smem, size = 0x4, offset = 0x4, fixed_abs, tag = 'smem constant byte address 0x4 - core index']
  #allocation1 [shape = 'u32[72,128]{1,0:T(1,128)}', space=vmem, size = 0x9000, scoped, tag = 'internal scratch']
  %s0 = inlined_call_operand.vmem [shape: f32[2,8,32], index: 0, kind: input, shape index: {}]
  %s1 = inlined_call_operand.vmem [shape: bf16[16,193], index: 1, kind: input, shape index: {}]
  %s2 = inlined_call_operand.vmem [shape: bf16[16,193], index: 2, kind: input, shape index: {}]
  %s3 = inlined_call_operand.vmem [shape: f32[1,193], index: 3, kind: input, shape index: {}]
  %s4 = inlined_call_operand.vmem [shape: bf16[65,1024], index: 4, kind: input, shape index: {}]
  %s5 = inlined_call_operand.vmem [shape: s32[1,56], index: 5, kind: input, shape index: {}]
  %s6 = inlined_call_operand.vmem [shape: f32[2,7,56], index: 6, kind: output, shape index: {}]
  %s7 = sld [smem:[#allocation0]]
  $region57: #{const_scorer_forward.1} parent=0
    _
  %s9 = ssub.s32 1, %s7
  %s10 = scalar_select 0, %s9, %s7
  loop: start=0, step=1, limit=4
  $region2: #{const_scorer_forward.1} parent=0 // loop_pre_header
    _
  $region3: #{const_scorer_forward.1} parent=0 // loop_header
    %s12 = sphi 0, %s16
    %p13 = scmp.ge.s32.totalorder %s12, 4
    %s22 = sphi 0, %s24
    %s25 = sphi 0, %s22
    %s26 = sphi 0, %s25
    %s42 = sphi 0, %s26
    %s46 = sphi 0, %s46
    %s48 = sphi 0, %s46
    %s49 = sphi 0, %s48
    %s63 = sphi 0, %s49
    %s67 = sphi 0, %s67
    %s69 = sphi 0, %s67
    %s70 = sphi 0, %s69
    %s84 = sphi 0, %s70
    %s88 = sphi 0, %s88
    %s90 = sphi 0, %s88
    %s91 = sphi 0, %s90
    %s105 = sphi 0, %s91
    %s109 = sphi 0, %s109
    %s111 = sphi 0, %s109
    %s112 = sphi 0, %s111
    %s126 = sphi 0, %s112
    %s130 = sphi 0, %s130
    %s132 = sphi 0, %s130
    %s133 = sphi 0, %s132
    %s147 = sphi 0, %s133
    %s153 = sphi 0, %s155
    %s156 = sphi 0, %s153
    %s157 = sphi 0, %s156
    %s173 = sphi 0, %s157
  $region4: #{const_scorer_forward.1} parent=0 // loop_header_branch
    %15 = sbr.rel (%p13) target = $region8
  $region5: #{const_scorer_forward.1} parent=0 // loop_body
    %s17 = ssub.s32 %s12, 1
    %s18 = ssub.s32 %s12, 2
    %s19 = sadd.s32 %s12, 1
    %s20 = ssub.s32 %s12, %s19
    %p21 = scmp.eq.s32.totalorder %s20, 0
    %s23 = sadd.s32 %s22, 1
    %s24 = scalar_select %p21, %s22, %s23
    %p27 = pneg %p21
    %p28 = scmp.eq.s32.totalorder %s12, 1
    %p29 = por %p27, %p28
    %p30 = scmp.ne.s32.totalorder %s22, %s25
    %p31 = scmp.eq.s32.totalorder %s12, 0
    %p32 = por %p30, %p31
    %p33 = scmp.ne.s32.totalorder %s22, %s25
    %p34 = scmp.eq.s32.totalorder %s17, 1
    %p35 = por %p33, %p34
    %p36 = scmp.ne.s32.totalorder %s25, %s26
    %p37 = scmp.eq.s32.totalorder %s17, 0
    %p38 = por %p36, %p37
    %p39 = scmp.ne.s32.totalorder %s25, %s26
    %p40 = scmp.eq.s32.totalorder %s18, 1
    %p41 = por %p39, %p40
    %p43 = scmp.ne.s32.totalorder %s26, %s42
    %p44 = scmp.eq.s32.totalorder %s18, 0
    %p45 = por %p43, %p44
    %s47 = sadd.s32 %s46, 1
    %p50 = scmp.eq.s32.totalorder %s12, 1
    %p51 = scmp.ne.s32.totalorder %s46, %s48
    %p52 = scmp.eq.s32.totalorder %s12, 0
    %p53 = por %p51, %p52
    %p54 = scmp.ne.s32.totalorder %s46, %s48
    %p55 = scmp.eq.s32.totalorder %s17, 1
    %p56 = por %p54, %p55
    %p57 = scmp.ne.s32.totalorder %s48, %s49
    %p58 = scmp.eq.s32.totalorder %s17, 0
    %p59 = por %p57, %p58
    %p60 = scmp.ne.s32.totalorder %s48, %s49
    %p61 = scmp.eq.s32.totalorder %s18, 1
    %p62 = por %p60, %p61
    %p64 = scmp.ne.s32.totalorder %s49, %s63
    %p65 = scmp.eq.s32.totalorder %s18, 0
    %p66 = por %p64, %p65
    %s68 = sadd.s32 %s67, 1
    %p71 = scmp.eq.s32.totalorder %s12, 1
    %p72 = scmp.ne.s32.totalorder %s67, %s69
    %p73 = scmp.eq.s32.totalorder %s12, 0
    %p74 = por %p72, %p73
    %p75 = scmp.ne.s32.totalorder %s67, %s69
    %p76 = scmp.eq.s32.totalorder %s17, 1
    %p77 = por %p75, %p76
    %p78 = scmp.ne.s32.totalorder %s69, %s70
    %p79 = scmp.eq.s32.totalorder %s17, 0
    %p80 = por %p78, %p79
    %p81 = scmp.ne.s32.totalorder %s69, %s70
    %p82 = scmp.eq.s32.totalorder %s18, 1
    %p83 = por %p81, %p82
    %p85 = scmp.ne.s32.totalorder %s70, %s84
    %p86 = scmp.eq.s32.totalorder %s18, 0
    %p87 = por %p85, %p86
    %s89 = sadd.s32 %s88, 1
    %p92 = scmp.eq.s32.totalorder %s12, 1
    %p93 = scmp.ne.s32.totalorder %s88, %s90
    %p94 = scmp.eq.s32.totalorder %s12, 0
    %p95 = por %p93, %p94
    %p96 = scmp.ne.s32.totalorder %s88, %s90
    %p97 = scmp.eq.s32.totalorder %s17, 1
    %p98 = por %p96, %p97
    %p99 = scmp.ne.s32.totalorder %s90, %s91
    %p100 = scmp.eq.s32.totalorder %s17, 0
    %p101 = por %p99, %p100
    %p102 = scmp.ne.s32.totalorder %s90, %s91
    %p103 = scmp.eq.s32.totalorder %s18, 1
    %p104 = por %p102, %p103
    %p106 = scmp.ne.s32.totalorder %s91, %s105
    %p107 = scmp.eq.s32.totalorder %s18, 0
    %p108 = por %p106, %p107
    %s110 = sadd.s32 %s109, 1
    %p113 = scmp.eq.s32.totalorder %s12, 1
    %p114 = scmp.ne.s32.totalorder %s109, %s111
    %p115 = scmp.eq.s32.totalorder %s12, 0
    %p116 = por %p114, %p115
    %p117 = scmp.ne.s32.totalorder %s109, %s111
    %p118 = scmp.eq.s32.totalorder %s17, 1
    %p119 = por %p117, %p118
    %p120 = scmp.ne.s32.totalorder %s111, %s112
    %p121 = scmp.eq.s32.totalorder %s17, 0
    %p122 = por %p120, %p121
    %p123 = scmp.ne.s32.totalorder %s111, %s112
    %p124 = scmp.eq.s32.totalorder %s18, 1
    %p125 = por %p123, %p124
    %p127 = scmp.ne.s32.totalorder %s112, %s126
    %p128 = scmp.eq.s32.totalorder %s18, 0
    %p129 = por %p127, %p128
    %s131 = sadd.s32 %s130, 1
    %p134 = scmp.eq.s32.totalorder %s12, 1
    %p135 = scmp.ne.s32.totalorder %s130, %s132
    %p136 = scmp.eq.s32.totalorder %s12, 0
    %p137 = por %p135, %p136
    %p138 = scmp.ne.s32.totalorder %s130, %s132
    %p139 = scmp.eq.s32.totalorder %s17, 1
    %p140 = por %p138, %p139
    %p141 = scmp.ne.s32.totalorder %s132, %s133
    %p142 = scmp.eq.s32.totalorder %s17, 0
    %p143 = por %p141, %p142
    %p144 = scmp.ne.s32.totalorder %s132, %s133
    %p145 = scmp.eq.s32.totalorder %s18, 1
    %p146 = por %p144, %p145
    %p148 = scmp.ne.s32.totalorder %s133, %s147
    %p149 = scmp.eq.s32.totalorder %s18, 0
    %p150 = por %p148, %p149
    %s151 = ssub.s32 %s12, %s19
    %p152 = scmp.eq.s32.totalorder %s151, 0
    %s154 = sadd.s32 %s153, 1
    %s155 = scalar_select %p152, %s153, %s154
    %p158 = pneg %p152
    %p159 = scmp.eq.s32.totalorder %s12, 1
    %p160 = por %p158, %p159
    %p161 = scmp.ne.s32.totalorder %s153, %s156
    %p162 = scmp.eq.s32.totalorder %s12, 0
    %p163 = por %p161, %p162
    %p164 = scmp.ne.s32.totalorder %s153, %s156
    %p165 = scmp.eq.s32.totalorder %s17, 1
    %p166 = por %p164, %p165
    %p167 = scmp.ne.s32.totalorder %s156, %s157
    %p168 = scmp.eq.s32.totalorder %s17, 0
    %p169 = por %p167, %p168
    %p170 = scmp.ne.s32.totalorder %s156, %s157
    %p171 = scmp.eq.s32.totalorder %s18, 1
    %p172 = por %p170, %p171
    %p174 = scmp.ne.s32.totalorder %s157, %s173
    %p175 = scmp.eq.s32.totalorder %s18, 0
    %p176 = por %p174, %p175
    %p177 = scmp.le.s32.totalorder 1, %s12
    %p178 = scmp.lt.s32.totalorder %s12, 3
    %p179 = pnand %p177, %p178
    %p180 = pneg %p179
    // Predicated region
    $region9: #{const_scorer_forward.1} parent=5 // pred_check
      _
    $region10: #{const_scorer_forward.1} parent=5 // pred_check_branch
      %182 = sbr.rel (%p179) target = $region12
    $region11: #{const_scorer_forward.1} parent=5 // pred_region
      %s183 = ssub.s32 %s12, 1
      // Predicated region
      $region13: #{const_scorer_forward.1} parent=11 // pred_check
        %p184 = pneg %p59
      $region14: #{const_scorer_forward.1} parent=11 // pred_check_branch
        %186 = sbr.rel (%p184) target = $region16
      $region15: #{const_scorer_forward.1} parent=11 // pred_region
        _
      $region16: #{const_scorer_forward.1} parent=11 // pred_fallthru
        _
      // Predicated region
      $region17: #{const_scorer_forward.1} parent=11 // pred_check
        %p187 = pneg %p80
      $region18: #{const_scorer_forward.1} parent=11 // pred_check_branch
        %189 = sbr.rel (%p187) target = $region20
      $region19: #{const_scorer_forward.1} parent=11 // pred_region
        _
      $region20: #{const_scorer_forward.1} parent=11 // pred_fallthru
        _
      // Predicated region
      $region21: #{const_scorer_forward.1} parent=11 // pred_check
        %p190 = pneg %p101
      $region22: #{const_scorer_forward.1} parent=11 // pred_check_branch
        %192 = sbr.rel (%p190) target = $region24
      $region23: #{const_scorer_forward.1} parent=11 // pred_region
        _
      $region24: #{const_scorer_forward.1} parent=11 // pred_fallthru
        _
      // Predicated region
      $region25: #{const_scorer_forward.1} parent=11 // pred_check
        %p193 = pneg %p122
      $region26: #{const_scorer_forward.1} parent=11 // pred_check_branch
        %195 = sbr.rel (%p193) target = $region28
      $region27: #{const_scorer_forward.1} parent=11 // pred_region
        _
      $region28: #{const_scorer_forward.1} parent=11 // pred_fallthru
        _
      // Predicated region
      $region29: #{const_scorer_forward.1} parent=11 // pred_check
        %p196 = pneg %p143
      $region30: #{const_scorer_forward.1} parent=11 // pred_check_branch
        %198 = sbr.rel (%p196) target = $region32
      $region31: #{const_scorer_forward.1} parent=11 // pred_region
        _
      $region32: #{const_scorer_forward.1} parent=11 // pred_fallthru
        _
    $region12: #{const_scorer_forward.1} parent=5 // pred_fallthru
      _
    %p199 = scmp.lt.s32.totalorder %s12, 2
    // Predicated region
    $region33: #{const_scorer_forward.1} parent=5 // pred_check
      %p200 = pneg %p199
    $region34: #{const_scorer_forward.1} parent=5 // pred_check_branch
      %202 = sbr.rel (%p200) target = $region36
    $region35: #{const_scorer_forward.1} parent=5 // pred_region
      // Predicated region
      $region37: #{const_scorer_forward.1} parent=35 // pred_check
        %p203 = pneg %p32
      $region38: #{const_scorer_forward.1} parent=35 // pred_check_branch
        %205 = sbr.rel (%p203) target = $region40
      $region39: #{const_scorer_forward.1} parent=35 // pred_region
        %p206 = scmp.lt.s32.totalorder %s12, 1
        %s207 = scalar_select %p206, %s12, 1
        %s208 = smul.addr %s207, 8
        %s209 = scalar_lea.vmem %s0, %s208
      $region40: #{const_scorer_forward.1} parent=35 // pred_fallthru
        _
    $region36: #{const_scorer_forward.1} parent=5 // pred_fallthru
      _
    %p210 = scmp.le.s32.totalorder 1, %s12
    %p211 = scmp.lt.s32.totalorder %s12, 3
    %p212 = pnand %p210, %p211
    %p213 = pneg %p212
    // Predicated region
    $region41: #{const_scorer_forward.1} parent=5 // pred_check
      _
    $region42: #{const_scorer_forward.1} parent=5 // pred_check_branch
      %215 = sbr.rel (%p212) target = $region44
    $region43: #{const_scorer_forward.1} parent=5 // pred_region
      %s216 = ssub.s32 %s12, 1
      %p217 = scmp.lt.s32.totalorder %s17, 1
      %s218 = scalar_select %p217, %s17, 1
      %s219 = smul.addr %s218, 8
      %s220 = scalar_lea.vmem %s0, %s219
      %p221 = pneg %p38
      %p222 = pneg %p35
      %p223 = pneg %p59
      %p224 = pneg %p56
      %p225 = pneg %p80
      %p226 = pneg %p77
      %p227 = pneg %p101
      %p228 = pneg %p98
      %p229 = pneg %p122
      %p230 = pneg %p119
      %p231 = pneg %p143
      %p232 = pneg %p140
      %p233 = pneg %p169
      %p234 = pneg %p166
      %p235 = scmp.lt.s32.totalorder %s17, 1
      %s236 = scalar_select %p235, %s17, 1
      %s237 = smul.addr %s236, 8
      %s238 = scalar_lea.vmem %s6, %s237
      %p239 = scmp.lt.s32.totalorder %s17, 1
      %s240 = scalar_select %p239, %s17, 1
      %s241 = smul.addr %s240, 8
      %s242 = scalar_lea.vmem %s0, %s241
      %p243 = scmp.lt.s32.totalorder %s17, 1
      %s244 = scalar_select %p243, %s17, 1
      %s245 = smul.addr %s244, 8
      %s246 = scalar_lea.vmem %s6, %s245
      %v248 = vld [vmem:[%s242] sm:$0xff]
      %v249 = vpack.c.bf16 %v248, %v248
      %v250 = vld [vmem:[%s1] sm:$0xff]
      %v251 = vld [vmem:[%s1 + $0x8] sm:$0xff]
      %v252 = vld [vmem:[%s2] sm:$0xff]
      %v253 = vld [vmem:[%s2 + $0x8] sm:$0xff]
      %v255 = vshrl.u32 %v249, 16
      %v257 = vshll.u32 %v249, 16
      %v259 = vrot.slane %v257, 1
      %v260 = vor.u32 %v255, %v259
      %261 = vrot.lane.b32.xlu0 %v260, 112
      %v262 = vpop.permute.xlu0 %261
      %v265 = vunpack.c.l.b16 %v252
      %v266 = vunpack.c.h.b16 %v252
      %v267 = vunpack.c.l.b16 %v253
      %v268 = vunpack.c.h.b16 %v253
      %v269 = vpack.c.b16 %v267, %v265
      %v270 = vpack.c.b16 %v268, %v266
      %vm273 = vcmask 130048
      %v275 = vsel %vm273, %v262, 0
      %277 = vmatpush.bf16.msra.mxu0 0
      %278 = vmatpush.bf16.msra.mxu0 0
      %279 = vmatpush.bf16.msra.mxu0 0
      %280 = vmatpush.bf16.msra.mxu0 0
      %281 = vmatpush.bf16.msra.mxu0 0
      %282 = vmatpush.bf16.msra.mxu0 0
      %283 = vmatpush.bf16.msra.mxu0 0
      %284 = vmatpush.bf16.msra.mxu0 %v269
      %285 = vmatmul.bf16.gmra.mxu0 %v275
      %v286 = vpop.f32.mrf.mxu0
      %v287 = vadd.f32 0.0, %v286
      %v288 = vpop.f32.mrf.mxu0
      %289 = vdwg.mxu0
      %290 = vmatpush.bf16.msra.mxu0 0
      %291 = vmatpush.bf16.msra.mxu0 0
      %292 = vmatpush.bf16.msra.mxu0 0
      %293 = vmatpush.bf16.msra.mxu0 0
      %294 = vmatpush.bf16.msra.mxu0 0
      %295 = vmatpush.bf16.msra.mxu0 0
      %296 = vmatpush.bf16.msra.mxu0 0
      %297 = vmatpush.bf16.msra.mxu0 %v270
      %298 = vmatmul.bf16.gmra.mxu0 %v275
      %v299 = vpop.f32.mrf.mxu0
      %v300 = vadd.f32 0.0, %v299
      %v301 = vpop.f32.mrf.mxu0
      %302 = vdwg.mxu0
      %v305 = vunpack.c.l.b16 %v250
      %v306 = vunpack.c.h.b16 %v250
      %v307 = vunpack.c.l.b16 %v251
      %v308 = vunpack.c.h.b16 %v251
      %v309 = vpack.c.b16 %v307, %v305
      %v310 = vpack.c.b16 %v308, %v306
      %v313 = vsel %vm273, %v249, 0
      %315 = vmatpush.bf16.msra.mxu0 0
      %316 = vmatpush.bf16.msra.mxu0 0
      %317 = vmatpush.bf16.msra.mxu0 0
      %318 = vmatpush.bf16.msra.mxu0 0
      %319 = vmatpush.bf16.msra.mxu0 0
      %320 = vmatpush.bf16.msra.mxu0 0
      %321 = vmatpush.bf16.msra.mxu0 0
      %322 = vmatpush.bf16.msra.mxu0 %v309
      %323 = vmatmul.bf16.gmra.mxu0 %v313
      %v324 = vpop.f32.mrf.mxu0
      %v325 = vadd.f32 %v287, %v324
      %v326 = vpop.f32.mrf.mxu0
      %327 = vdwg.mxu0
      %328 = vmatpush.bf16.msra.mxu0 0
      %329 = vmatpush.bf16.msra.mxu0 0
      %330 = vmatpush.bf16.msra.mxu0 0
      %331 = vmatpush.bf16.msra.mxu0 0
      %332 = vmatpush.bf16.msra.mxu0 0
      %333 = vmatpush.bf16.msra.mxu0 0
      %334 = vmatpush.bf16.msra.mxu0 0
      %335 = vmatpush.bf16.msra.mxu0 %v310
      %336 = vmatmul.bf16.gmra.mxu0 %v313
      %v337 = vpop.f32.mrf.mxu0
      %v338 = vadd.f32 %v300, %v337
      %v339 = vpop.f32.mrf.mxu0
      %340 = vdwg.mxu0
      %v341 = vld [vmem:[%s3] sm:$0x3]
      %v343 = vperm.slane %v341, 0
      %v344 = vperm.slane %v341, 1
      %v347 = vadd.f32 %v325, %v343
      %v348 = vadd.f32 %v338, %v344
      %vm349 = vcmp.gt.f32.partialorder %v347, 0.0
      %vm350 = vcmp.gt.f32.partialorder %v348, 0.0
      %v351 = vmul.f32 %v347, 0.1
      %v352 = vmul.f32 %v348, 0.1
      %v353 = vsel %vm349, %v347, %v351
      %v354 = vsel %vm350, %v348, %v352
      %v355 = vpack.c.bf16 %v353, %v353
      %v356 = vpack.c.bf16 %v354, %v354
      %v357 = vld [vmem:[%s4] sm:$0xff]
      %v358 = vld [vmem:[%s4 + $0x8] sm:$0xff]
      %v359 = vld [vmem:[%s4 + $0x10] sm:$0xff]
      %v360 = vld [vmem:[%s4 + $0x18] sm:$0xff]
      %v361 = vld [vmem:[%s4 + $0x20] sm:$0xff]
      %v362 = vld [vmem:[%s4 + $0x28] sm:$0xff]
      %v363 = vld [vmem:[%s4 + $0x30] sm:$0xff]
      %v364 = vld [vmem:[%s4 + $0x38] sm:$0xff]
      %v365 = vld [vmem:[%s4 + $0x40] sm:$0xff]
      %v366 = vld [vmem:[%s4 + $0x48] sm:$0xff]
      %v367 = vld [vmem:[%s4 + $0x50] sm:$0xff]
      %v368 = vld [vmem:[%s4 + $0x58] sm:$0xff]
      %v369 = vld [vmem:[%s4 + $0x60] sm:$0xff]
      %v370 = vld [vmem:[%s4 + $0x68] sm:$0xff]
      %v371 = vld [vmem:[%s4 + $0x70] sm:$0xff]
      %v372 = vld [vmem:[%s4 + $0x78] sm:$0xff]
      %v373 = vld [vmem:[%s4 + $0x80] sm:$0xff]
      %v374 = vld [vmem:[%s4 + $0x88] sm:$0xff]
      %v375 = vld [vmem:[%s4 + $0x90] sm:$0xff]
      %v376 = vld [vmem:[%s4 + $0x98] sm:$0xff]
      %v377 = vld [vmem:[%s4 + $0xa0] sm:$0xff]
      %v378 = vld [vmem:[%s4 + $0xa8] sm:$0xff]
      %v379 = vld [vmem:[%s4 + $0xb0] sm:$0xff]
      %v380 = vld [vmem:[%s4 + $0xb8] sm:$0xff]
      %v381 = vld [vmem:[%s4 + $0xc0] sm:$0xff]
      %v382 = vld [vmem:[%s4 + $0xc8] sm:$0xff]
      %v383 = vld [vmem:[%s4 + $0xd0] sm:$0xff]
      %v384 = vld [vmem:[%s4 + $0xd8] sm:$0xff]
      %v385 = vld [vmem:[%s4 + $0xe0] sm:$0xff]
      %v386 = vld [vmem:[%s4 + $0xe8] sm:$0xff]
      %v387 = vld [vmem:[%s4 + $0xf0] sm:$0xff]
      %v388 = vld [vmem:[%s4 + $0xf8] sm:$0xff]
      %v389 = vld [vmem:[%s4 + $0x100] sm:$0x11]
      %v390 = vld [vmem:[%s4 + $0x108] sm:$0x11]
      %v391 = vld [vmem:[%s4 + $0x110] sm:$0x11]
      %v392 = vld [vmem:[%s4 + $0x118] sm:$0x11]
      %v429 = vunpack.c.l.b16 %v357
      %v430 = vunpack.c.h.b16 %v357
      %v431 = vunpack.c.l.b16 %v358
      %v432 = vunpack.c.h.b16 %v358
      %v433 = vunpack.c.l.b16 %v359
      %v434 = vunpack.c.h.b16 %v359
      %v435 = vunpack.c.l.b16 %v360
      %v436 = vunpack.c.h.b16 %v360
      %v437 = vunpack.c.l.b16 %v361
      %v438 = vunpack.c.h.b16 %v361
      %v439 = vunpack.c.l.b16 %v362
      %v440 = vunpack.c.h.b16 %v362
      %v441 = vunpack.c.l.b16 %v363
      %v442 = vunpack.c.h.b16 %v363
      %v443 = vunpack.c.l.b16 %v364
      %v444 = vunpack.c.h.b16 %v364
      %v445 = vunpack.c.l.b16 %v365
      %v446 = vunpack.c.h.b16 %v365
      %v447 = vunpack.c.l.b16 %v366
      %v448 = vunpack.c.h.b16 %v366
      %v449 = vunpack.c.l.b16 %v367
      %v450 = vunpack.c.h.b16 %v367
      %v451 = vunpack.c.l.b16 %v368
      %v452 = vunpack.c.h.b16 %v368
      %v453 = vunpack.c.l.b16 %v369
      %v454 = vunpack.c.h.b16 %v369
      %v455 = vunpack.c.l.b16 %v370
      %v456 = vunpack.c.h.b16 %v370
      %v457 = vunpack.c.l.b16 %v371
      %v458 = vunpack.c.h.b16 %v371
      %v459 = vunpack.c.l.b16 %v372
      %v460 = vunpack.c.h.b16 %v372
      %v461 = vunpack.c.l.b16 %v373
      %v462 = vunpack.c.h.b16 %v373
      %v463 = vunpack.c.l.b16 %v374
      %v464 = vunpack.c.h.b16 %v374
      %v465 = vunpack.c.l.b16 %v375
      %v466 = vunpack.c.h.b16 %v375
      %v467 = vunpack.c.l.b16 %v376
      %v468 = vunpack.c.h.b16 %v376
      %v469 = vunpack.c.l.b16 %v377
      %v470 = vunpack.c.h.b16 %v377
      %v471 = vunpack.c.l.b16 %v378
      %v472 = vunpack.c.h.b16 %v378
      %v473 = vunpack.c.l.b16 %v379
      %v474 = vunpack.c.h.b16 %v379
      %v475 = vunpack.c.l.b16 %v380
      %v476 = vunpack.c.h.b16 %v380
      %v477 = vunpack.c.l.b16 %v381
      %v478 = vunpack.c.h.b16 %v381
      %v479 = vunpack.c.l.b16 %v382
      %v480 = vunpack.c.h.b16 %v382
      %v481 = vunpack.c.l.b16 %v383
      %v482 = vunpack.c.h.b16 %v383
      %v483 = vunpack.c.l.b16 %v384
      %v484 = vunpack.c.h.b16 %v384
      %v485 = vunpack.c.l.b16 %v385
      %v486 = vunpack.c.h.b16 %v385
      %v487 = vunpack.c.l.b16 %v386
      %v488 = vunpack.c.h.b16 %v386
      %v489 = vunpack.c.l.b16 %v387
      %v490 = vunpack.c.h.b16 %v387
      %v491 = vunpack.c.l.b16 %v388
      %v492 = vunpack.c.h.b16 %v388
      %v493 = vunpack.c.l.b16 %v389
      %v494 = vunpack.c.h.b16 %v389
      %v495 = vunpack.c.l.b16 %v390
      %v496 = vunpack.c.h.b16 %v390
      %v497 = vunpack.c.l.b16 %v391
      %v498 = vunpack.c.h.b16 %v391
      %v499 = vunpack.c.l.b16 %v392
      %v500 = vunpack.c.h.b16 %v392
      %v501 = vpack.c.b16 %v437, %v429
      %v502 = vpack.c.b16 %v438, %v430
      %v503 = vpack.c.b16 %v439, %v431
      %v504 = vpack.c.b16 %v440, %v432
      %v505 = vpack.c.b16 %v441, %v433
      %v506 = vpack.c.b16 %v442, %v434
      %v507 = vpack.c.b16 %v443, %v435
      %v508 = vpack.c.b16 %v444, %v436
      %v509 = vpack.c.b16 %v453, %v445
      %v510 = vpack.c.b16 %v454, %v446
      %v511 = vpack.c.b16 %v455, %v447
      %v512 = vpack.c.b16 %v456, %v448
      %v513 = vpack.c.b16 %v457, %v449
      %v514 = vpack.c.b16 %v458, %v450
      %v515 = vpack.c.b16 %v459, %v451
      %v516 = vpack.c.b16 %v460, %v452
      %v517 = vpack.c.b16 %v469, %v461
      %v518 = vpack.c.b16 %v470, %v462
      %v519 = vpack.c.b16 %v471, %v463
      %v520 = vpack.c.b16 %v472, %v464
      %v521 = vpack.c.b16 %v473, %v465
      %v522 = vpack.c.b16 %v474, %v466
      %v523 = vpack.c.b16 %v475, %v467
      %v524 = vpack.c.b16 %v476, %v468
      %v525 = vpack.c.b16 %v485, %v477
      %v526 = vpack.c.b16 %v486, %v478
      %v527 = vpack.c.b16 %v487, %v479
      %v528 = vpack.c.b16 %v488, %v480
      %v529 = vpack.c.b16 %v489, %v481
      %v530 = vpack.c.b16 %v490, %v482
      %v531 = vpack.c.b16 %v491, %v483
      %v532 = vpack.c.b16 %v492, %v484
      %v533 = vpack.c.b16 %v493, %v493
      %v534 = vpack.c.b16 %v494, %v494
      %v535 = vpack.c.b16 %v495, %v495
      %v536 = vpack.c.b16 %v496, %v496
      %v537 = vpack.c.b16 %v497, %v497
      %v538 = vpack.c.b16 %v498, %v498
      %v539 = vpack.c.b16 %v499, %v499
      %v540 = vpack.c.b16 %v500, %v500
      %vm573 = vcmask 531456
      %v575 = vsel %vm573, %v356, 0
      %vm577 = vcmask 1040384
      %v578 = vsel 0, 4294967295, 65535
      %v579 = vsel %vm577, %v578, 0
      %v581 = vand.u32 %v533, %v579
      %v584 = vand.u32 %v534, %v579
      %v587 = vand.u32 %v535, %v579
      %v590 = vand.u32 %v536, %v579
      %v593 = vand.u32 %v537, %v579
      %v596 = vand.u32 %v538, %v579
      %v599 = vand.u32 %v539, %v579
      %v602 = vand.u32 %v540, %v579
      %604 = vmatpush.bf16.msra.mxu0 0
      %605 = vmatpush.bf16.msra.mxu0 0
      %606 = vmatpush.bf16.msra.mxu0 0
      %607 = vmatpush.bf16.msra.mxu0 %v581
      %608 = vmatpush.bf16.msra.mxu0 %v525
      %609 = vmatpush.bf16.msra.mxu0 %v517
      %610 = vmatpush.bf16.msra.mxu0 %v509
      %611 = vmatpush.bf16.msra.mxu0 %v501
      %612 = vmatmul.bf16.gmra.mxu0 %v575
      %v613 = vpop.f32.mrf.mxu0
      %v614 = vadd.f32 0.0, %v613
      %v615 = vpop.f32.mrf.mxu0
      %616 = vdwg.mxu0
      %617 = vmatpush.bf16.msra.mxu0 0
      %618 = vmatpush.bf16.msra.mxu0 0
      %619 = vmatpush.bf16.msra.mxu0 0
      %620 = vmatpush.bf16.msra.mxu0 %v584
      %621 = vmatpush.bf16.msra.mxu0 %v526
      %622 = vmatpush.bf16.msra.mxu0 %v518
      %623 = vmatpush.bf16.msra.mxu0 %v510
      %624 = vmatpush.bf16.msra.mxu0 %v502
      %625 = vmatmul.bf16.gmra.mxu0 %v575
      %v626 = vpop.f32.mrf.mxu0
      %v627 = vadd.f32 0.0, %v626
      %v628 = vpop.f32.mrf.mxu0
      %629 = vdwg.mxu0
      %630 = vmatpush.bf16.msra.mxu0 0
      %631 = vmatpush.bf16.msra.mxu0 0
      %632 = vmatpush.bf16.msra.mxu0 0
      %633 = vmatpush.bf16.msra.mxu0 %v587
      %634 = vmatpush.bf16.msra.mxu0 %v527
      %635 = vmatpush.bf16.msra.mxu0 %v519
      %636 = vmatpush.bf16.msra.mxu0 %v511
      %637 = vmatpush.bf16.msra.mxu0 %v503
      %638 = vmatmul.bf16.gmra.mxu0 %v575
      %v639 = vpop.f32.mrf.mxu0
      %v640 = vadd.f32 0.0, %v639
      %v641 = vpop.f32.mrf.mxu0
      %642 = vdwg.mxu0
      %643 = vmatpush.bf16.msra.mxu0 0
      %644 = vmatpush.bf16.msra.mxu0 0
      %645 = vmatpush.bf16.msra.mxu0 0
      %646 = vmatpush.bf16.msra.mxu0 %v590
      %647 = vmatpush.bf16.msra.mxu0 %v528
      %648 = vmatpush.bf16.msra.mxu0 %v520
      %649 = vmatpush.bf16.msra.mxu0 %v512
      %650 = vmatpush.bf16.msra.mxu0 %v504
      %651 = vmatmul.bf16.gmra.mxu0 %v575
      %v652 = vpop.f32.mrf.mxu0
      %v653 = vadd.f32 0.0, %v652
      %v654 = vpop.f32.mrf.mxu0
      %655 = vdwg.mxu0
      %656 = vmatpush.bf16.msra.mxu0 0
      %657 = vmatpush.bf16.msra.mxu0 0
      %658 = vmatpush.bf16.msra.mxu0 0
      %659 = vmatpush.bf16.msra.mxu0 %v593
      %660 = vmatpush.bf16.msra.mxu0 %v529
      %661 = vmatpush.bf16.msra.mxu0 %v521
      %662 = vmatpush.bf16.msra.mxu0 %v513
      %663 = vmatpush.bf16.msra.mxu0 %v505
      %664 = vmatmul.bf16.gmra.mxu0 %v575
      %v665 = vpop.f32.mrf.mxu0
      %v666 = vadd.f32 0.0, %v665
      %v667 = vpop.f32.mrf.mxu0
      %668 = vdwg.mxu0
      %669 = vmatpush.bf16.msra.mxu0 0
      %670 = vmatpush.bf16.msra.mxu0 0
      %671 = vmatpush.bf16.msra.mxu0 0
      %672 = vmatpush.bf16.msra.mxu0 %v596
      %673 = vmatpush.bf16.msra.mxu0 %v530
      %674 = vmatpush.bf16.msra.mxu0 %v522
      %675 = vmatpush.bf16.msra.mxu0 %v514
      %676 = vmatpush.bf16.msra.mxu0 %v506
      %677 = vmatmul.bf16.gmra.mxu0 %v575
      %v678 = vpop.f32.mrf.mxu0
      %v679 = vadd.f32 0.0, %v678
      %v680 = vpop.f32.mrf.mxu0
      %681 = vdwg.mxu0
      %682 = vmatpush.bf16.msra.mxu0 0
      %683 = vmatpush.bf16.msra.mxu0 0
      %684 = vmatpush.bf16.msra.mxu0 0
      %685 = vmatpush.bf16.msra.mxu0 %v599
      %686 = vmatpush.bf16.msra.mxu0 %v531
      %687 = vmatpush.bf16.msra.mxu0 %v523
      %688 = vmatpush.bf16.msra.mxu0 %v515
      %689 = vmatpush.bf16.msra.mxu0 %v507
      %690 = vmatmul.bf16.gmra.mxu0 %v575
      %v691 = vpop.f32.mrf.mxu0
      %v692 = vadd.f32 0.0, %v691
      %v693 = vpop.f32.mrf.mxu0
      %694 = vdwg.mxu0
      %695 = vmatpush.bf16.msra.mxu0 0
      %696 = vmatpush.bf16.msra.mxu0 0
      %697 = vmatpush.bf16.msra.mxu0 0
      %698 = vmatpush.bf16.msra.mxu0 %v602
      %699 = vmatpush.bf16.msra.mxu0 %v532
      %700 = vmatpush.bf16.msra.mxu0 %v524
      %701 = vmatpush.bf16.msra.mxu0 %v516
      %702 = vmatpush.bf16.msra.mxu0 %v508
      %703 = vmatmul.bf16.gmra.mxu0 %v575
      %v704 = vpop.f32.mrf.mxu0
      %v705 = vadd.f32 0.0, %v704
      %v706 = vpop.f32.mrf.mxu0
      %707 = vdwg.mxu0
      %v716 = vrot.slane %v627, 7
      %v717 = vrot.slane %v640, 6
      %v718 = vrot.slane %v653, 5
      %v719 = vrot.slane %v666, 4
      %v720 = vrot.slane %v679, 3
      %v721 = vrot.slane %v692, 2
      %v722 = vrot.slane %v705, 1
      %v723 = vsel %vm577, %v614, %v716
      %vm724 = vcmask 1042434
      %v725 = vsel %vm724, %v717, %v718
      %vm726 = vcmask 1041408
      %v727 = vsel %vm726, %v723, %v725
      %vm728 = vcmask 1044484
      %v729 = vsel %vm728, %v719, %v720
      %vm730 = vcmask 1046534
      %v731 = vsel %vm730, %v721, %v722
      %vm732 = vcmask 1045508
      %v733 = vsel %vm732, %v729, %v731
      %vm734 = vcmask 1043456
      %v735 = vsel %vm734, %v727, %v733
      %vm736 = vcmask 1041409
      %v737 = vsel %vm736, %v614, %v716
      %vm738 = vcmask 1043459
      %v739 = vsel %vm738, %v717, %v718
      %vm740 = vcmask 1042433
      %v741 = vsel %vm740, %v737, %v739
      %vm742 = vcmask 1045509
      %v743 = vsel %vm742, %v719, %v720
      %vm744 = vcmask 1046528
      %v745 = vsel %vm744, %v722, %v721
      %vm746 = vcmask 1046533
      %v747 = vsel %vm746, %v743, %v745
      %vm748 = vcmask 1044481
      %v749 = vsel %vm748, %v741, %v747
      %v750 = vrot.slane %v749, 1
      %v751 = vsel %vm724, %v614, %v716
      %v752 = vsel %vm728, %v717, %v718
      %vm753 = vcmask 1043458
      %v754 = vsel %vm753, %v751, %v752
      %v755 = vsel %vm730, %v719, %v720
      %v756 = vsel %vm577, %v721, %v722
      %vm757 = vcmask 1045504
      %v758 = vsel %vm757, %v756, %v755
      %vm759 = vcmask 1045506
      %v760 = vsel %vm759, %v754, %v758
      %v761 = vrot.slane %v760, 2
      %v762 = vsel %vm738, %v614, %v716
      %v763 = vsel %vm742, %v717, %v718
      %vm764 = vcmask 1044483
      %v765 = vsel %vm764, %v762, %v763
      %v766 = vsel %vm744, %v720, %v719
      %v767 = vsel %vm736, %v721, %v722
      %vm768 = vcmask 1046529
      %v769 = vsel %vm768, %v767, %v766
      %vm770 = vcmask 1046531
      %v771 = vsel %vm770, %v765, %v769
      %v772 = vrot.slane %v771, 3
      %v773 = vsel %vm728, %v614, %v716
      %v774 = vsel %vm730, %v717, %v718
      %v775 = vsel %vm732, %v773, %v774
      %v776 = vsel %vm577, %v719, %v720
      %v777 = vsel %vm724, %v721, %v722
      %v778 = vsel %vm726, %v776, %v777
      %v779 = vsel %vm734, %v778, %v775
      %v780 = vrot.slane %v779, 4
      %v781 = vsel %vm742, %v614, %v716
      %v782 = vsel %vm744, %v718, %v717
      %v783 = vsel %vm746, %v781, %v782
      %v784 = vsel %vm736, %v719, %v720
      %v785 = vsel %vm738, %v721, %v722
      %v786 = vsel %vm740, %v784, %v785
      %v787 = vsel %vm748, %v786, %v783
      %v788 = vrot.slane %v787, 5
      %v789 = vsel %vm730, %v614, %v716
      %v790 = vsel %vm577, %v717, %v718
      %v791 = vsel %vm757, %v790, %v789
      %v792 = vsel %vm724, %v719, %v720
      %v793 = vsel %vm728, %v721, %v722
      %v794 = vsel %vm753, %v792, %v793
      %v795 = vsel %vm759, %v794, %v791
      %v796 = vrot.slane %v795, 6
      %v804 = vpack.c.bf16 %v750, %v735
      %v805 = vpack.c.bf16 %v772, %v761
      %v806 = vpack.c.bf16 %v788, %v780
      %v807 = vpack.c.bf16 %v796, %v796
      %808 = vmatpush.bf16.xpose.msra.mxu0 0
      %809 = vmatpush.bf16.xpose.msra.mxu0 0
      %810 = vmatpush.bf16.xpose.msra.mxu0 0
      %811 = vmatpush.bf16.xpose.msra.mxu0 0
      %812 = vmatpush.bf16.xpose.msra.mxu0 %v807
      %813 = vmatpush.bf16.xpose.msra.mxu0 %v806
      %814 = vmatpush.bf16.xpose.msra.mxu0 %v805
      %815 = vmatpush.bf16.xpose.msra.mxu0 %v804
      %816 = vmatmul.bf16.gmra.mxu0 %v355
      %v817 = vpop.f32.mrf.mxu0
      %v818 = vadd.f32 0.0, %v817
      %v819 = vpop.f32.mrf.mxu0
      %820 = vdwg.mxu0
      %v821 = vlaneseq
      %v822 = vshrl.u32 %v821, 7
      %v823 = vlaneseq
      %v824 = vand.u32 %v823, 127
      %v825 = vadd.s32 %v822, 1
      %v826 = vmul.u32 %v825, 8
      %vm827 = vcmp.eq.s32.totalorder %v824, %v826
      %v828 = vld [vmem:[%s5] sm:$0x1]
      %v829 = vperm.slane %v828, 0
      %vm830 = vcmp.ne.s32.totalorder %v829, 0
      %vm831 = vmxor %vm827, 1
      %vm832 = vmand %vm830, %vm831
      %v833 = vsel %vm832, -1e+09, %v818
      %vm834 = vcmask 456704
      %835 = vst.msk [vmem:[%s246] sm:$0x7f] %vm834, %v833
      %p836 = scmp.lt.s32.totalorder %s17, 1
      %s837 = scalar_select %p836, %s17, 1
      %s838 = smul.addr %s837, 8
      %s839 = scalar_lea.vmem %s6, %s838
      // Predicated region
      $region45: #{const_scorer_forward.1} parent=43 // pred_check
        %p840 = pneg %p166
      $region46: #{const_scorer_forward.1} parent=43 // pred_check_branch
        %842 = sbr.rel (%p840) target = $region48
      $region47: #{const_scorer_forward.1} parent=43 // pred_region
        _
      $region48: #{const_scorer_forward.1} parent=43 // pred_fallthru
        _
    $region44: #{const_scorer_forward.1} parent=5 // pred_fallthru
      _
    %p843 = scmp.le.s32.totalorder 2, %s12
    // Predicated region
    $region49: #{const_scorer_forward.1} parent=5 // pred_check
      %p844 = pneg %p843
    $region50: #{const_scorer_forward.1} parent=5 // pred_check_branch
      %846 = sbr.rel (%p844) target = $region52
    $region51: #{const_scorer_forward.1} parent=5 // pred_region
      %s847 = ssub.s32 %s12, 2
      // Predicated region
      $region53: #{const_scorer_forward.1} parent=51 // pred_check
        %p848 = pneg %p172
      $region54: #{const_scorer_forward.1} parent=51 // pred_check_branch
        %850 = sbr.rel (%p848) target = $region56
      $region55: #{const_scorer_forward.1} parent=51 // pred_region
        %p851 = scmp.lt.s32.totalorder %s18, 1
        %s852 = scalar_select %p851, %s18, 1
        %s853 = smul.addr %s852, 8
        %s854 = scalar_lea.vmem %s6, %s853
      $region56: #{const_scorer_forward.1} parent=51 // pred_fallthru
        _
    $region52: #{const_scorer_forward.1} parent=5 // pred_fallthru
      _
  $region6: #{const_scorer_forward.1} parent=0 // loop_footer
    %s16 = sadd.s32 1, %s12
  $region7: #{const_scorer_forward.1} parent=0 // loop_footer_branch
    %11 = sbr.rel target = $region3
  $region8: #{const_scorer_forward.1} parent=0 // loop_exit
    _

</llo_original>
